<compile_context>
chip_gen: v5e
topology: v5e:2x2
jax: 0.10.0
libtpu: 0.0.40
codegen_flags: <defaults>
</compile_context>

<pallas_src>
import jax
import jax.numpy as jnp
from jax.experimental import pallas as pl
from jax.experimental.pallas import tpu as pltpu


TILE_B = 512  # batch tile on the lane axis; multiple of 128, tiny VMEM footprint on v5e/v6e/v7x


def mlp_kernel(x_ref, w1_ref, b1_ref, w2_ref, b2_ref, w3_ref, b3_ref, o_ref):
    # Layout: batch on the lane (last) axis, hidden dim H on sublanes.
    x = x_ref[...]                                            # (1, TILE_B)

    # fc1 + sigmoid: contraction dim K=1 -> pure outer product, keep it on the VPU.
    h1 = jax.nn.sigmoid(w1_ref[...] * x + b1_ref[...])        # (H,1)*(1,TB)+(H,1) -> (H, TB)

    # fc2 + sigmoid: well-shaped MXU matmul (M=H, K=H, N=TILE_B), f32 accumulate.
    h2 = jnp.dot(w2_ref[...], h1, preferred_element_type=jnp.float32)
    h2 = jax.nn.sigmoid(h2 + b2_ref[...])                     # (H, TB)

    # fc3: output dim N=1 -> elementwise multiply + sublane reduce (XLU), skip the MXU.
    out = jnp.sum(w3_ref[...] * h2, axis=0, keepdims=True) + b3_ref[...]  # (1, TB)
    o_ref[...] = out.astype(o_ref.dtype)                      # lane-dense (1, TILE_B) store


def regression_net_forward(x, params):
    """x: (B, 1) float32 (PyTorch layout). Returns (B, 1) float32."""
    w1, b1 = params["w1"], params["b1"]   # (H, 1), (H,)   PyTorch (out, in) layout
    w2, b2 = params["w2"], params["b2"]   # (H, H), (H,)
    w3, b3 = params["w3"], params["b3"]   # (1, H), (1,)
    H = w1.shape[0]
    B = x.shape[0]

    # Lane-dense layout: batch on the last (lane) axis; pad up to a multiple of TILE_B.
    Bp = ((B + TILE_B - 1) // TILE_B) * TILE_B
    x_row = jnp.zeros((1, Bp), jnp.float32).at[:, :B].set(x.reshape(1, B))

    w1c = w1.reshape(H, 1).astype(jnp.float32)
    b1c = b1.reshape(H, 1).astype(jnp.float32)
    w2m = w2.astype(jnp.float32)                   # (out, in): h2 = w2 @ h1
    b2c = b2.reshape(H, 1).astype(jnp.float32)
    w3c = w3.reshape(H, 1).astype(jnp.float32)     # column for the sublane reduce
    b3c = b3.reshape(1, 1).astype(jnp.float32)

    grid = (Bp // TILE_B,)
    batch_spec = pl.BlockSpec((1, TILE_B), lambda i: (0, i))       # tiled along lanes
    const_spec = lambda shape: pl.BlockSpec(shape, lambda i: (0, 0))  # weights: resident

    flops = 2 * Bp * H * H + 4 * Bp * H            # fc2 matmul + fc1/fc3 elementwise
    bytes_accessed = 4 * (2 * Bp + H * H + 4 * H + 1)

    out_row = pl.pallas_call(
        mlp_kernel,
        out_shape=jax.ShapeDtypeStruct((1, Bp), jnp.float32),
        grid=grid,
        in_specs=[
            batch_spec,            # x        (1, Bp)
            const_spec((H, 1)),    # w1
            const_spec((H, 1)),    # b1
            const_spec((H, H)),    # w2
            const_spec((H, 1)),    # b2
            const_spec((H, 1)),    # w3
            const_spec((1, 1)),    # b3
        ],
        out_specs=batch_spec,
        compiler_params=pltpu.CompilerParams(
            dimension_semantics=("parallel",)),
        cost_estimate=pl.CostEstimate(
            flops=flops,
            transcendentals=2 * Bp * H,
            bytes_accessed=bytes_accessed),
    )(x_row, w1c, b1c, w2m, b2c, w3c, b3c)

    return out_row[:, :B].reshape(B, 1)


def init_params(key, n_hidden_neu):
    """Deterministic init mimicking torch.nn.Linear default U(-1/sqrt(fan_in), 1/sqrt(fan_in)).
    Weights stored in PyTorch (out_features, in_features) layout."""
    ks = jax.random.split(key, 6)

    def lin(kw, kb, fan_in, fan_out):
        bound = 1.0 / jnp.sqrt(jnp.float32(fan_in))
        w = jax.random.uniform(kw, (fan_out, fan_in), jnp.float32, -bound, bound)
        b = jax.random.uniform(kb, (fan_out,), jnp.float32, -bound, bound)
        return w, b

    w1, b1 = lin(ks[0], ks[1], 1, n_hidden_neu)
    w2, b2 = lin(ks[2], ks[3], n_hidden_neu, n_hidden_neu)
    w3, b3 = lin(ks[4], ks[5], n_hidden_neu, 1)
    return {"w1": w1, "b1": b1, "w2": w2, "b2": b2, "w3": w3, "b3": b3}


def _reference(x, params):
    h1 = jax.nn.sigmoid(x @ params["w1"].T + params["b1"])
    h2 = jax.nn.sigmoid(h1 @ params["w2"].T + params["b2"])
    return h2 @ params["w3"].T + params["b3"]


if __name__ == "__main__":
    key = jax.random.PRNGKey(0)
    k_x, k_x2, k_p = jax.random.split(key, 3)

    n_hidden_neu = 32
    params = init_params(k_p, n_hidden_neu)

    # Small shape consistent with the module's forward (B, 1).
    batch = 8
    x = jax.random.normal(k_x, (batch, 1), dtype=jnp.float32)
    out = jax.block_until_ready(regression_net_forward(x, params))
    ref = _reference(x, params)
    assert out.shape == (batch, 1)
    assert jnp.allclose(out, ref, atol=1e-5, rtol=1e-5)

    # Second check crossing a tile boundary (exercises padding + multi-step grid).
    batch2 = 1000
    x2 = jax.random.normal(k_x2, (batch2, 1), dtype=jnp.float32)
    out2 = jax.block_until_ready(regression_net_forward(x2, params))
    ref2 = _reference(x2, params)
    assert out2.shape == (batch2, 1)
    assert jnp.allclose(out2, ref2, atol=1e-5, rtol=1e-5)

    print("KERNEL_OK")
</pallas_src>

<mosaic_0001>
module attributes {stable_mosaic.version = 11 : i64} {
  func.func @mlp_kernel(%arg0: i32, %arg1: memref<1x512xf32, #tpu.memory_space<vmem>>, %arg2: memref<32x1xf32, #tpu.memory_space<vmem>>, %arg3: memref<32x1xf32, #tpu.memory_space<vmem>>, %arg4: memref<32x32xf32, #tpu.memory_space<vmem>>, %arg5: memref<32x1xf32, #tpu.memory_space<vmem>>, %arg6: memref<32x1xf32, #tpu.memory_space<vmem>>, %arg7: memref<1x1xf32, #tpu.memory_space<vmem>>, %arg8: memref<1x512xf32, #tpu.memory_space<vmem>>) attributes {dimension_semantics = [#tpu.dimension_semantics<parallel>], iteration_bounds = array<i64: 1>, scalar_prefetch = 0 : i64, scratch_operands = 0 : i64, tpu.core_type = #tpu.core_type<tc>, window_params = [{transform_indices = @transform_0, window_bounds = array<i64: 1, 512>}, {pipeline_mode = #tpu.pipeline_mode<synchronous>, transform_indices = @transform_1, window_bounds = array<i64: 32, 1>}, {pipeline_mode = #tpu.pipeline_mode<synchronous>, transform_indices = @transform_2, window_bounds = array<i64: 32, 1>}, {pipeline_mode = #tpu.pipeline_mode<synchronous>, transform_indices = @transform_3, window_bounds = array<i64: 32, 32>}, {pipeline_mode = #tpu.pipeline_mode<synchronous>, transform_indices = @transform_4, window_bounds = array<i64: 32, 1>}, {pipeline_mode = #tpu.pipeline_mode<synchronous>, transform_indices = @transform_5, window_bounds = array<i64: 32, 1>}, {pipeline_mode = #tpu.pipeline_mode<synchronous>, transform_indices = @transform_6, window_bounds = array<i64: 1, 1>}, {transform_indices = @transform_7, window_bounds = array<i64: 1, 512>}]} {
    %c0 = arith.constant 0 : index
    %c0_0 = arith.constant 0 : index
    %0 = vector.load %arg1[%c0, %c0_0] : memref<1x512xf32, #tpu.memory_space<vmem>>, vector<1x512xf32>
    %c0_1 = arith.constant 0 : index
    %c0_2 = arith.constant 0 : index
    %1 = vector.load %arg2[%c0_1, %c0_2] : memref<32x1xf32, #tpu.memory_space<vmem>>, vector<32x1xf32>
    %2 = vector.broadcast %1 : vector<32x1xf32> to vector<32x512xf32>
    %3 = vector.broadcast %0 : vector<1x512xf32> to vector<32x512xf32>
    %4 = arith.mulf %2, %3 : vector<32x512xf32>
    %c0_3 = arith.constant 0 : index
    %c0_4 = arith.constant 0 : index
    %5 = vector.load %arg3[%c0_3, %c0_4] : memref<32x1xf32, #tpu.memory_space<vmem>>, vector<32x1xf32>
    %6 = vector.broadcast %5 : vector<32x1xf32> to vector<32x512xf32>
    %7 = arith.addf %4, %6 : vector<32x512xf32>
    %8 = arith.negf %7 : vector<32x512xf32>
    %9 = math.exp %8 : vector<32x512xf32>
    %cst = arith.constant 1.000000e+00 : f32
    %10 = vector.broadcast %cst : f32 to vector<32x512xf32>
    %11 = arith.addf %10, %9 : vector<32x512xf32>
    %12 = arith.divf %10, %11 : vector<32x512xf32>
    %c0_5 = arith.constant 0 : index
    %c0_6 = arith.constant 0 : index
    %13 = vector.load %arg4[%c0_5, %c0_6] : memref<32x32xf32, #tpu.memory_space<vmem>>, vector<32x32xf32>
    %cst_7 = arith.constant dense<0.000000e+00> : vector<32x512xf32>
    %14 = tpu.matmul %13, %12, %cst_7 {dimension_numbers = #tpu.dot_dimension_numbers<[1], [0], [0], [1], [0, 0, 1, 1], [], []>} : vector<32x32xf32>, vector<32x512xf32>, vector<32x512xf32> -> vector<32x512xf32>
    %c0_8 = arith.constant 0 : index
    %c0_9 = arith.constant 0 : index
    %15 = vector.load %arg5[%c0_8, %c0_9] : memref<32x1xf32, #tpu.memory_space<vmem>>, vector<32x1xf32>
    %16 = vector.broadcast %15 : vector<32x1xf32> to vector<32x512xf32>
    %17 = arith.addf %14, %16 : vector<32x512xf32>
    %18 = arith.negf %17 : vector<32x512xf32>
    %19 = math.exp %18 : vector<32x512xf32>
    %cst_10 = arith.constant 1.000000e+00 : f32
    %20 = vector.broadcast %cst_10 : f32 to vector<32x512xf32>
    %21 = arith.addf %20, %19 : vector<32x512xf32>
    %22 = arith.divf %20, %21 : vector<32x512xf32>
    %c0_11 = arith.constant 0 : index
    %c0_12 = arith.constant 0 : index
    %23 = vector.load %arg6[%c0_11, %c0_12] : memref<32x1xf32, #tpu.memory_space<vmem>>, vector<32x1xf32>
    %24 = vector.broadcast %23 : vector<32x1xf32> to vector<32x512xf32>
    %25 = arith.mulf %24, %22 : vector<32x512xf32>
    %cst_13 = arith.constant dense<0.000000e+00> : vector<512xf32>
    %26 = vector.multi_reduction <add>, %25, %cst_13 [0] : vector<32x512xf32> to vector<512xf32>
    %27 = vector.shape_cast %26 : vector<512xf32> to vector<1x512xf32>
    %c0_14 = arith.constant 0 : index
    %c0_15 = arith.constant 0 : index
    %28 = vector.load %arg7[%c0_14, %c0_15] : memref<1x1xf32, #tpu.memory_space<vmem>>, vector<1x1xf32>
    %29 = vector.broadcast %28 : vector<1x1xf32> to vector<1x512xf32>
    %30 = arith.addf %27, %29 : vector<1x512xf32>
    %c0_16 = arith.constant 0 : index
    %c0_17 = arith.constant 0 : index
    %31 = vector.load %arg8[%c0_16, %c0_17] : memref<1x512xf32, #tpu.memory_space<vmem>>, vector<1x512xf32>
    tpu.vector_store %arg8[%c0_16, %c0_17], %30 {strides = array<i32>} : memref<1x512xf32, #tpu.memory_space<vmem>>, vector<1x512xf32>,
    return
  }
  func.func @transform_0(%arg0: i32) -> (i32, i32) {
    %c0_i32 = arith.constant 0 : i32
    %c0_i32_0 = arith.constant 0 : i32
    return %c0_i32, %arg0 : i32, i32
  }
  func.func @transform_1(%arg0: i32) -> (i32, i32) {
    %c0_i32 = arith.constant 0 : i32
    %c0_i32_0 = arith.constant 0 : i32
    %c0_i32_1 = arith.constant 0 : i32
    return %c0_i32, %c0_i32_0 : i32, i32
  }
  func.func @transform_2(%arg0: i32) -> (i32, i32) {
    %c0_i32 = arith.constant 0 : i32
    %c0_i32_0 = arith.constant 0 : i32
    %c0_i32_1 = arith.constant 0 : i32
    return %c0_i32, %c0_i32_0 : i32, i32
  }
  func.func @transform_3(%arg0: i32) -> (i32, i32) {
    %c0_i32 = arith.constant 0 : i32
    %c0_i32_0 = arith.constant 0 : i32
    %c0_i32_1 = arith.constant 0 : i32
    return %c0_i32, %c0_i32_0 : i32, i32
  }
  func.func @transform_4(%arg0: i32) -> (i32, i32) {
    %c0_i32 = arith.constant 0 : i32
    %c0_i32_0 = arith.constant 0 : i32
    %c0_i32_1 = arith.constant 0 : i32
    return %c0_i32, %c0_i32_0 : i32, i32
  }
  func.func @transform_5(%arg0: i32) -> (i32, i32) {
    %c0_i32 = arith.constant 0 : i32
    %c0_i32_0 = arith.constant 0 : i32
    %c0_i32_1 = arith.constant 0 : i32
    return %c0_i32, %c0_i32_0 : i32, i32
  }
  func.func @transform_6(%arg0: i32) -> (i32, i32) {
    %c0_i32 = arith.constant 0 : i32
    %c0_i32_0 = arith.constant 0 : i32
    %c0_i32_1 = arith.constant 0 : i32
    return %c0_i32, %c0_i32_0 : i32, i32
  }
  func.func @transform_7(%arg0: i32) -> (i32, i32) {
    %c0_i32 = arith.constant 0 : i32
    %c0_i32_0 = arith.constant 0 : i32
    return %c0_i32, %arg0 : i32, i32
  }
}

</mosaic_0001>

<llo_original>
// kernel: tpu_custom_call.1
$region0: #{tpu_custom_call.1}
  #allocation0 [shape = 'u32[]', space=smem, size = 0x4, offset = 0x4, fixed_abs, tag = 'smem constant byte address 0x4 - core index']
  #allocation1 [shape = 'u32[72,128]{1,0:T(1,128)}', space=vmem, size = 0x9000, scoped, tag = 'internal scratch']
  #allocation2 [shape = 'f32[1,1]{1,0:T(1,128)S(1)}', space=vmem, size = 0x200, scoped, tag = 'scoped memory for tpu_custom_call.1']
  %s0 = inlined_call_operand.vmem [shape: f32[1,512], index: 0, kind: input, shape index: {}]
  %s1 = inlined_call_operand.vmem [shape: f32[32,1], index: 1, kind: input, shape index: {}]
  %s2 = inlined_call_operand.vmem [shape: f32[32,1], index: 2, kind: input, shape index: {}]
  %s3 = inlined_call_operand.vmem [shape: f32[32,32], index: 3, kind: input, shape index: {}]
  %s4 = inlined_call_operand.vmem [shape: f32[32,1], index: 4, kind: input, shape index: {}]
  %s5 = inlined_call_operand.vmem [shape: f32[32,1], index: 5, kind: input, shape index: {}]
  %s6 = inlined_call_operand.<no memory space> [shape: f32[1,1], index: 6, kind: input, shape index: {}]
  %s7 = inlined_call_operand.hbm [shape: f32[1,512], index: 7, kind: output, shape index: {}]
  %s8 = sld [smem:[#allocation0]]
  $region38: #{tpu_custom_call.1} parent=0
    _
  %s10 = ssub.s32 1, %s8
  %s11 = scalar_select 0, %s10, %s8
  %v12 = vstv %s6
  %13 = vst [vmem:[#allocation2] sm:$0x1] %v12
  $region1: #{tpu_custom_call.1} parent=0
    #allocation3 [shape = 'u8[2048]{0}', space=vmem, size = 0x800, scoped, tag = 'output window, operand 0, single buffered']
    #allocation4 [shape = 's32[1]{0}', space=sflag, size = 0x4, scoped, tag = 'scoped memory for tpu_custom_call.1']
    %14 = vsyncpa [#allocation4], 0
    // Predicated region
    $region2: #{tpu_custom_call.1} parent=1 // pred_check
      _
    $region3: #{tpu_custom_call.1} parent=1 // pred_check_branch
      %16 = sbr.rel (0) target = $region5
    $region4: #{tpu_custom_call.1} parent=1 // pred_region
      _
    $region5: #{tpu_custom_call.1} parent=1 // pred_fallthru
      _
    // Predicated region
    $region6: #{tpu_custom_call.1} parent=1 // pred_check
      _
    $region7: #{tpu_custom_call.1} parent=1 // pred_check_branch
      %18 = sbr.rel (0) target = $region9
    $region8: #{tpu_custom_call.1} parent=1 // pred_region
      _
    $region9: #{tpu_custom_call.1} parent=1 // pred_fallthru
      _
    // Predicated region
    $region10: #{tpu_custom_call.1} parent=1 // pred_check
      _
    $region11: #{tpu_custom_call.1} parent=1 // pred_check_branch
      %20 = sbr.rel (0) target = $region13
    $region12: #{tpu_custom_call.1} parent=1 // pred_region
      _
    $region13: #{tpu_custom_call.1} parent=1 // pred_fallthru
      _
    // Predicated region
    $region14: #{tpu_custom_call.1} parent=1 // pred_check
      _
    $region15: #{tpu_custom_call.1} parent=1 // pred_check_branch
      %22 = sbr.rel (0) target = $region17
    $region16: #{tpu_custom_call.1} parent=1 // pred_region
      _
    $region17: #{tpu_custom_call.1} parent=1 // pred_fallthru
      _
    // Predicated region
    $region18: #{tpu_custom_call.1} parent=1 // pred_check
      _
    $region19: #{tpu_custom_call.1} parent=1 // pred_check_branch
      %24 = sbr.rel (0) target = $region21
    $region20: #{tpu_custom_call.1} parent=1 // pred_region
      _
    $region21: #{tpu_custom_call.1} parent=1 // pred_fallthru
      _
    // Predicated region
    $region22: #{tpu_custom_call.1} parent=1 // pred_check
      _
    $region23: #{tpu_custom_call.1} parent=1 // pred_check_branch
      %26 = sbr.rel (0) target = $region25
    $region24: #{tpu_custom_call.1} parent=1 // pred_region
      _
    $region25: #{tpu_custom_call.1} parent=1 // pred_fallthru
      _
    // Predicated region
    $region26: #{tpu_custom_call.1} parent=1 // pred_check
      _
    $region27: #{tpu_custom_call.1} parent=1 // pred_check_branch
      %28 = sbr.rel (0) target = $region29
    $region28: #{tpu_custom_call.1} parent=1 // pred_region
      _
    $region29: #{tpu_custom_call.1} parent=1 // pred_fallthru
      _
    %v29 = vld [vmem:[%s0] sm:$0xf]
    %v30 = vld [vmem:[%s1] sm:$0xff]
    %v31 = vld [vmem:[%s1 + $0x8] sm:$0xff]
    %v32 = vld [vmem:[%s1 + $0x10] sm:$0xff]
    %v33 = vld [vmem:[%s1 + $0x18] sm:$0xff]
    %35 = vset.pattern.permute.xlu0 0
    %36 = vperm.xlu0 %35, %v30
    %v37 = vpop.permute.xlu0 %36
    %40 = vset.pattern.permute.xlu0 0
    %41 = vperm.xlu0 %40, %v31
    %v42 = vpop.permute.xlu0 %41
    %45 = vset.pattern.permute.xlu0 0
    %46 = vperm.xlu0 %45, %v32
    %v47 = vpop.permute.xlu0 %46
    %50 = vset.pattern.permute.xlu0 0
    %51 = vperm.xlu0 %50, %v33
    %v52 = vpop.permute.xlu0 %51
    %v55 = vperm.slane %v29, 0
    %v56 = vperm.slane %v29, 1
    %v57 = vperm.slane %v29, 2
    %v58 = vperm.slane %v29, 3
    %v63 = vmul.f32 %v37, %v55
    %v64 = vmul.f32 %v37, %v56
    %v65 = vmul.f32 %v37, %v57
    %v66 = vmul.f32 %v37, %v58
    %v67 = vmul.f32 %v42, %v55
    %v68 = vmul.f32 %v42, %v56
    %v69 = vmul.f32 %v42, %v57
    %v70 = vmul.f32 %v42, %v58
    %v71 = vmul.f32 %v47, %v55
    %v72 = vmul.f32 %v47, %v56
    %v73 = vmul.f32 %v47, %v57
    %v74 = vmul.f32 %v47, %v58
    %v75 = vmul.f32 %v52, %v55
    %v76 = vmul.f32 %v52, %v56
    %v77 = vmul.f32 %v52, %v57
    %v78 = vmul.f32 %v52, %v58
    %v79 = vld [vmem:[%s2] sm:$0xff]
    %v80 = vld [vmem:[%s2 + $0x8] sm:$0xff]
    %v81 = vld [vmem:[%s2 + $0x10] sm:$0xff]
    %v82 = vld [vmem:[%s2 + $0x18] sm:$0xff]
    %84 = vset.pattern.permute.xlu0 0
    %85 = vperm.xlu0 %84, %v79
    %v86 = vpop.permute.xlu0 %85
    %89 = vset.pattern.permute.xlu0 0
    %90 = vperm.xlu0 %89, %v80
    %v91 = vpop.permute.xlu0 %90
    %94 = vset.pattern.permute.xlu0 0
    %95 = vperm.xlu0 %94, %v81
    %v96 = vpop.permute.xlu0 %95
    %99 = vset.pattern.permute.xlu0 0
    %100 = vperm.xlu0 %99, %v82
    %v101 = vpop.permute.xlu0 %100
    %v103 = vadd.f32 %v63, %v86
    %v104 = vadd.f32 %v64, %v86
    %v105 = vadd.f32 %v65, %v86
    %v106 = vadd.f32 %v66, %v86
    %v107 = vadd.f32 %v67, %v91
    %v108 = vadd.f32 %v68, %v91
    %v109 = vadd.f32 %v69, %v91
    %v110 = vadd.f32 %v70, %v91
    %v111 = vadd.f32 %v71, %v96
    %v112 = vadd.f32 %v72, %v96
    %v113 = vadd.f32 %v73, %v96
    %v114 = vadd.f32 %v74, %v96
    %v115 = vadd.f32 %v75, %v101
    %v116 = vadd.f32 %v76, %v101
    %v117 = vadd.f32 %v77, %v101
    %v118 = vadd.f32 %v78, %v101
    %v119 = vxor.u32 %v103, 2147483648
    %v120 = vxor.u32 %v104, 2147483648
    %v121 = vxor.u32 %v105, 2147483648
    %v122 = vxor.u32 %v106, 2147483648
    %v123 = vxor.u32 %v107, 2147483648
    %v124 = vxor.u32 %v108, 2147483648
    %v125 = vxor.u32 %v109, 2147483648
    %v126 = vxor.u32 %v110, 2147483648
    %v127 = vxor.u32 %v111, 2147483648
    %v128 = vxor.u32 %v112, 2147483648
    %v129 = vxor.u32 %v113, 2147483648
    %v130 = vxor.u32 %v114, 2147483648
    %v131 = vxor.u32 %v115, 2147483648
    %v132 = vxor.u32 %v116, 2147483648
    %v133 = vxor.u32 %v117, 2147483648
    %v134 = vxor.u32 %v118, 2147483648
    %v135 = vmul.f32 %v119, 1.442695
    %v136 = vpow.pop %v135
    %v137 = vmul.f32 %v120, 1.442695
    %v138 = vpow.pop %v137
    %v139 = vmul.f32 %v121, 1.442695
    %v140 = vpow.pop %v139
    %v141 = vmul.f32 %v122, 1.442695
    %v142 = vpow.pop %v141
    %v143 = vmul.f32 %v123, 1.442695
    %v144 = vpow.pop %v143
    %v145 = vmul.f32 %v124, 1.442695
    %v146 = vpow.pop %v145
    %v147 = vmul.f32 %v125, 1.442695
    %v148 = vpow.pop %v147
    %v149 = vmul.f32 %v126, 1.442695
    %v150 = vpow.pop %v149
    %v151 = vmul.f32 %v127, 1.442695
    %v152 = vpow.pop %v151
    %v153 = vmul.f32 %v128, 1.442695
    %v154 = vpow.pop %v153
    %v155 = vmul.f32 %v129, 1.442695
    %v156 = vpow.pop %v155
    %v157 = vmul.f32 %v130, 1.442695
    %v158 = vpow.pop %v157
    %v159 = vmul.f32 %v131, 1.442695
    %v160 = vpow.pop %v159
    %v161 = vmul.f32 %v132, 1.442695
    %v162 = vpow.pop %v161
    %v163 = vmul.f32 %v133, 1.442695
    %v164 = vpow.pop %v163
    %v165 = vmul.f32 %v134, 1.442695
    %v166 = vpow.pop %v165
    %v167 = vadd.f32 %v136, 1.0
    %v168 = vadd.f32 %v138, 1.0
    %v169 = vadd.f32 %v140, 1.0
    %v170 = vadd.f32 %v142, 1.0
    %v171 = vadd.f32 %v144, 1.0
    %v172 = vadd.f32 %v146, 1.0
    %v173 = vadd.f32 %v148, 1.0
    %v174 = vadd.f32 %v150, 1.0
    %v175 = vadd.f32 %v152, 1.0
    %v176 = vadd.f32 %v154, 1.0
    %v177 = vadd.f32 %v156, 1.0
    %v178 = vadd.f32 %v158, 1.0
    %v179 = vadd.f32 %v160, 1.0
    %v180 = vadd.f32 %v162, 1.0
    %v181 = vadd.f32 %v164, 1.0
    %v182 = vadd.f32 %v166, 1.0
    %v183 = vrcp.pop %v167
    %v184 = vmul.f32 %v167, %v183
    %v185 = vsub.f32 1.0, %v184
    %v186 = vmul.f32 %v183, %v185
    %v187 = vadd.f32 %v183, %v186
    %vm188 = vweird.f32 %v167
    %vm189 = vweird.f32 %v183
    %vm190 = vmor %vm188, %vm189
    %v191 = vsel %vm190, %v183, %v187
    %v192 = vand.u32 2147483647, %v167
    %vm193 = vcmp.eq.f32.partialorder %v192, 8.507059e+37
    %v194 = vand.u32 %v167, 2147483648
    %v195 = vor.u32 1.1754944e-38, %v194
    %v196 = vsel %vm193, %v195, %v191
    %v197 = vmul.f32 1.0, %v196
    %v198 = vrcp.pop %v168
    %v199 = vmul.f32 %v168, %v198
    %v200 = vsub.f32 1.0, %v199
    %v201 = vmul.f32 %v198, %v200
    %v202 = vadd.f32 %v198, %v201
    %vm203 = vweird.f32 %v168
    %vm204 = vweird.f32 %v198
    %vm205 = vmor %vm203, %vm204
    %v206 = vsel %vm205, %v198, %v202
    %v207 = vand.u32 2147483647, %v168
    %vm208 = vcmp.eq.f32.partialorder %v207, 8.507059e+37
    %v209 = vand.u32 %v168, 2147483648
    %v210 = vor.u32 1.1754944e-38, %v209
    %v211 = vsel %vm208, %v210, %v206
    %v212 = vmul.f32 1.0, %v211
    %v213 = vrcp.pop %v169
    %v214 = vmul.f32 %v169, %v213
    %v215 = vsub.f32 1.0, %v214
    %v216 = vmul.f32 %v213, %v215
    %v217 = vadd.f32 %v213, %v216
    %vm218 = vweird.f32 %v169
    %vm219 = vweird.f32 %v213
    %vm220 = vmor %vm218, %vm219
    %v221 = vsel %vm220, %v213, %v217
    %v222 = vand.u32 2147483647, %v169
    %vm223 = vcmp.eq.f32.partialorder %v222, 8.507059e+37
    %v224 = vand.u32 %v169, 2147483648
    %v225 = vor.u32 1.1754944e-38, %v224
    %v226 = vsel %vm223, %v225, %v221
    %v227 = vmul.f32 1.0, %v226
    %v228 = vrcp.pop %v170
    %v229 = vmul.f32 %v170, %v228
    %v230 = vsub.f32 1.0, %v229
    %v231 = vmul.f32 %v228, %v230
    %v232 = vadd.f32 %v228, %v231
    %vm233 = vweird.f32 %v170
    %vm234 = vweird.f32 %v228
    %vm235 = vmor %vm233, %vm234
    %v236 = vsel %vm235, %v228, %v232
    %v237 = vand.u32 2147483647, %v170
    %vm238 = vcmp.eq.f32.partialorder %v237, 8.507059e+37
    %v239 = vand.u32 %v170, 2147483648
    %v240 = vor.u32 1.1754944e-38, %v239
    %v241 = vsel %vm238, %v240, %v236
    %v242 = vmul.f32 1.0, %v241
    %v243 = vrcp.pop %v171
    %v244 = vmul.f32 %v171, %v243
    %v245 = vsub.f32 1.0, %v244
    %v246 = vmul.f32 %v243, %v245
    %v247 = vadd.f32 %v243, %v246
    %vm248 = vweird.f32 %v171
    %vm249 = vweird.f32 %v243
    %vm250 = vmor %vm248, %vm249
    %v251 = vsel %vm250, %v243, %v247
    %v252 = vand.u32 2147483647, %v171
    %vm253 = vcmp.eq.f32.partialorder %v252, 8.507059e+37
    %v254 = vand.u32 %v171, 2147483648
    %v255 = vor.u32 1.1754944e-38, %v254
    %v256 = vsel %vm253, %v255, %v251
    %v257 = vmul.f32 1.0, %v256
    %v258 = vrcp.pop %v172
    %v259 = vmul.f32 %v172, %v258
    %v260 = vsub.f32 1.0, %v259
    %v261 = vmul.f32 %v258, %v260
    %v262 = vadd.f32 %v258, %v261
    %vm263 = vweird.f32 %v172
    %vm264 = vweird.f32 %v258
    %vm265 = vmor %vm263, %vm264
    %v266 = vsel %vm265, %v258, %v262
    %v267 = vand.u32 2147483647, %v172
    %vm268 = vcmp.eq.f32.partialorder %v267, 8.507059e+37
    %v269 = vand.u32 %v172, 2147483648
    %v270 = vor.u32 1.1754944e-38, %v269
    %v271 = vsel %vm268, %v270, %v266
    %v272 = vmul.f32 1.0, %v271
    %v273 = vrcp.pop %v173
    %v274 = vmul.f32 %v173, %v273
    %v275 = vsub.f32 1.0, %v274
    %v276 = vmul.f32 %v273, %v275
    %v277 = vadd.f32 %v273, %v276
    %vm278 = vweird.f32 %v173
    %vm279 = vweird.f32 %v273
    %vm280 = vmor %vm278, %vm279
    %v281 = vsel %vm280, %v273, %v277
    %v282 = vand.u32 2147483647, %v173
    %vm283 = vcmp.eq.f32.partialorder %v282, 8.507059e+37
    %v284 = vand.u32 %v173, 2147483648
    %v285 = vor.u32 1.1754944e-38, %v284
    %v286 = vsel %vm283, %v285, %v281
    %v287 = vmul.f32 1.0, %v286
    %v288 = vrcp.pop %v174
    %v289 = vmul.f32 %v174, %v288
    %v290 = vsub.f32 1.0, %v289
    %v291 = vmul.f32 %v288, %v290
    %v292 = vadd.f32 %v288, %v291
    %vm293 = vweird.f32 %v174
    %vm294 = vweird.f32 %v288
    %vm295 = vmor %vm293, %vm294
    %v296 = vsel %vm295, %v288, %v292
    %v297 = vand.u32 2147483647, %v174
    %vm298 = vcmp.eq.f32.partialorder %v297, 8.507059e+37
    %v299 = vand.u32 %v174, 2147483648
    %v300 = vor.u32 1.1754944e-38, %v299
    %v301 = vsel %vm298, %v300, %v296
    %v302 = vmul.f32 1.0, %v301
    %v303 = vrcp.pop %v175
    %v304 = vmul.f32 %v175, %v303
    %v305 = vsub.f32 1.0, %v304
    %v306 = vmul.f32 %v303, %v305
    %v307 = vadd.f32 %v303, %v306
    %vm308 = vweird.f32 %v175
    %vm309 = vweird.f32 %v303
    %vm310 = vmor %vm308, %vm309
    %v311 = vsel %vm310, %v303, %v307
    %v312 = vand.u32 2147483647, %v175
    %vm313 = vcmp.eq.f32.partialorder %v312, 8.507059e+37
    %v314 = vand.u32 %v175, 2147483648
    %v315 = vor.u32 1.1754944e-38, %v314
    %v316 = vsel %vm313, %v315, %v311
    %v317 = vmul.f32 1.0, %v316
    %v318 = vrcp.pop %v176
    %v319 = vmul.f32 %v176, %v318
    %v320 = vsub.f32 1.0, %v319
    %v321 = vmul.f32 %v318, %v320
    %v322 = vadd.f32 %v318, %v321
    %vm323 = vweird.f32 %v176
    %vm324 = vweird.f32 %v318
    %vm325 = vmor %vm323, %vm324
    %v326 = vsel %vm325, %v318, %v322
    %v327 = vand.u32 2147483647, %v176
    %vm328 = vcmp.eq.f32.partialorder %v327, 8.507059e+37
    %v329 = vand.u32 %v176, 2147483648
    %v330 = vor.u32 1.1754944e-38, %v329
    %v331 = vsel %vm328, %v330, %v326
    %v332 = vmul.f32 1.0, %v331
    %v333 = vrcp.pop %v177
    %v334 = vmul.f32 %v177, %v333
    %v335 = vsub.f32 1.0, %v334
    %v336 = vmul.f32 %v333, %v335
    %v337 = vadd.f32 %v333, %v336
    %vm338 = vweird.f32 %v177
    %vm339 = vweird.f32 %v333
    %vm340 = vmor %vm338, %vm339
    %v341 = vsel %vm340, %v333, %v337
    %v342 = vand.u32 2147483647, %v177
    %vm343 = vcmp.eq.f32.partialorder %v342, 8.507059e+37
    %v344 = vand.u32 %v177, 2147483648
    %v345 = vor.u32 1.1754944e-38, %v344
    %v346 = vsel %vm343, %v345, %v341
    %v347 = vmul.f32 1.0, %v346
    %v348 = vrcp.pop %v178
    %v349 = vmul.f32 %v178, %v348
    %v350 = vsub.f32 1.0, %v349
    %v351 = vmul.f32 %v348, %v350
    %v352 = vadd.f32 %v348, %v351
    %vm353 = vweird.f32 %v178
    %vm354 = vweird.f32 %v348
    %vm355 = vmor %vm353, %vm354
    %v356 = vsel %vm355, %v348, %v352
    %v357 = vand.u32 2147483647, %v178
    %vm358 = vcmp.eq.f32.partialorder %v357, 8.507059e+37
    %v359 = vand.u32 %v178, 2147483648
    %v360 = vor.u32 1.1754944e-38, %v359
    %v361 = vsel %vm358, %v360, %v356
    %v362 = vmul.f32 1.0, %v361
    %v363 = vrcp.pop %v179
    %v364 = vmul.f32 %v179, %v363
    %v365 = vsub.f32 1.0, %v364
    %v366 = vmul.f32 %v363, %v365
    %v367 = vadd.f32 %v363, %v366
    %vm368 = vweird.f32 %v179
    %vm369 = vweird.f32 %v363
    %vm370 = vmor %vm368, %vm369
    %v371 = vsel %vm370, %v363, %v367
    %v372 = vand.u32 2147483647, %v179
    %vm373 = vcmp.eq.f32.partialorder %v372, 8.507059e+37
    %v374 = vand.u32 %v179, 2147483648
    %v375 = vor.u32 1.1754944e-38, %v374
    %v376 = vsel %vm373, %v375, %v371
    %v377 = vmul.f32 1.0, %v376
    %v378 = vrcp.pop %v180
    %v379 = vmul.f32 %v180, %v378
    %v380 = vsub.f32 1.0, %v379
    %v381 = vmul.f32 %v378, %v380
    %v382 = vadd.f32 %v378, %v381
    %vm383 = vweird.f32 %v180
    %vm384 = vweird.f32 %v378
    %vm385 = vmor %vm383, %vm384
    %v386 = vsel %vm385, %v378, %v382
    %v387 = vand.u32 2147483647, %v180
    %vm388 = vcmp.eq.f32.partialorder %v387, 8.507059e+37
    %v389 = vand.u32 %v180, 2147483648
    %v390 = vor.u32 1.1754944e-38, %v389
    %v391 = vsel %vm388, %v390, %v386
    %v392 = vmul.f32 1.0, %v391
    %v393 = vrcp.pop %v181
    %v394 = vmul.f32 %v181, %v393
    %v395 = vsub.f32 1.0, %v394
    %v396 = vmul.f32 %v393, %v395
    %v397 = vadd.f32 %v393, %v396
    %vm398 = vweird.f32 %v181
    %vm399 = vweird.f32 %v393
    %vm400 = vmor %vm398, %vm399
    %v401 = vsel %vm400, %v393, %v397
    %v402 = vand.u32 2147483647, %v181
    %vm403 = vcmp.eq.f32.partialorder %v402, 8.507059e+37
    %v404 = vand.u32 %v181, 2147483648
    %v405 = vor.u32 1.1754944e-38, %v404
    %v406 = vsel %vm403, %v405, %v401
    %v407 = vmul.f32 1.0, %v406
    %v408 = vrcp.pop %v182
    %v409 = vmul.f32 %v182, %v408
    %v410 = vsub.f32 1.0, %v409
    %v411 = vmul.f32 %v408, %v410
    %v412 = vadd.f32 %v408, %v411
    %vm413 = vweird.f32 %v182
    %vm414 = vweird.f32 %v408
    %vm415 = vmor %vm413, %vm414
    %v416 = vsel %vm415, %v408, %v412
    %v417 = vand.u32 2147483647, %v182
    %vm418 = vcmp.eq.f32.partialorder %v417, 8.507059e+37
    %v419 = vand.u32 %v182, 2147483648
    %v420 = vor.u32 1.1754944e-38, %v419
    %v421 = vsel %vm418, %v420, %v416
    %v422 = vmul.f32 1.0, %v421
    %v423 = vld [vmem:[%s3] sm:$0xff]
    %v424 = vld [vmem:[%s3 + $0x8] sm:$0xff]
    %v425 = vld [vmem:[%s3 + $0x10] sm:$0xff]
    %v426 = vld [vmem:[%s3 + $0x18] sm:$0xff]
    %v427 = vld [vmem:[%s4] sm:$0xff]
    %v428 = vld [vmem:[%s4 + $0x8] sm:$0xff]
    %v429 = vld [vmem:[%s4 + $0x10] sm:$0xff]
    %v430 = vld [vmem:[%s4 + $0x18] sm:$0xff]
    %432 = vset.pattern.permute.xlu0 0
    %433 = vperm.xlu0 %432, %v427
    %v434 = vpop.permute.xlu0 %433
    %437 = vset.pattern.permute.xlu0 0
    %438 = vperm.xlu0 %437, %v428
    %v439 = vpop.permute.xlu0 %438
    %442 = vset.pattern.permute.xlu0 0
    %443 = vperm.xlu0 %442, %v429
    %v444 = vpop.permute.xlu0 %443
    %447 = vset.pattern.permute.xlu0 0
    %448 = vperm.xlu0 %447, %v430
    %v449 = vpop.permute.xlu0 %448
    %vm451 = vcmask 261120
    %v453 = vsel %vm451, %v423, 0
    %v456 = vsel %vm451, %v424, 0
    %v459 = vsel %vm451, %v425, 0
    %v462 = vsel %vm451, %v426, 0
    %464 = vmatpush.msra.mxu0 0.0
    %465 = vmatpush.msra.mxu0 0.0
    %466 = vmatpush.msra.mxu0 0.0
    %467 = vmatpush.msra.mxu0 0.0
    %468 = vmatpush.msra.mxu0 0.0
    %469 = vmatpush.msra.mxu0 0.0
    %470 = vmatpush.msra.mxu0 0.0
    %471 = vmatpush.msra.mxu0 0.0
    %472 = vmatpush.msra.mxu0 0.0
    %473 = vmatpush.msra.mxu0 0.0
    %474 = vmatpush.msra.mxu0 0.0
    %475 = vmatpush.msra.mxu0 0.0
    %476 = vmatpush.msra.mxu0 %v377
    %477 = vmatpush.msra.mxu0 %v317
    %478 = vmatpush.msra.mxu0 %v257
    %479 = vmatpush.msra.mxu0 %v197
    %480 = vmatmul.f32.gmra.mxu0 %v453
    %v481 = vpop.f32.mrf.mxu0
    %v482 = vadd.f32 %v434, %v481
    %483 = vmatmul.f32.gmra.mxu0 %v456
    %v484 = vpop.f32.mrf.mxu0
    %v485 = vadd.f32 %v439, %v484
    %486 = vmatmul.f32.gmra.mxu0 %v459
    %v487 = vpop.f32.mrf.mxu0
    %v488 = vadd.f32 %v444, %v487
    %489 = vmatmul.f32.gmra.mxu0 %v462
    %v490 = vpop.f32.mrf.mxu0
    %v491 = vadd.f32 %v449, %v490
    %492 = vdwg.mxu0
    %493 = vmatpush.msra.mxu0 0.0
    %494 = vmatpush.msra.mxu0 0.0
    %495 = vmatpush.msra.mxu0 0.0
    %496 = vmatpush.msra.mxu0 0.0
    %497 = vmatpush.msra.mxu0 0.0
    %498 = vmatpush.msra.mxu0 0.0
    %499 = vmatpush.msra.mxu0 0.0
    %500 = vmatpush.msra.mxu0 0.0
    %501 = vmatpush.msra.mxu0 0.0
    %502 = vmatpush.msra.mxu0 0.0
    %503 = vmatpush.msra.mxu0 0.0
    %504 = vmatpush.msra.mxu0 0.0
    %505 = vmatpush.msra.mxu0 %v392
    %506 = vmatpush.msra.mxu0 %v332
    %507 = vmatpush.msra.mxu0 %v272
    %508 = vmatpush.msra.mxu0 %v212
    %509 = vmatmul.f32.gmra.mxu0 %v453
    %v510 = vpop.f32.mrf.mxu0
    %v511 = vadd.f32 %v434, %v510
    %512 = vmatmul.f32.gmra.mxu0 %v456
    %v513 = vpop.f32.mrf.mxu0
    %v514 = vadd.f32 %v439, %v513
    %515 = vmatmul.f32.gmra.mxu0 %v459
    %v516 = vpop.f32.mrf.mxu0
    %v517 = vadd.f32 %v444, %v516
    %518 = vmatmul.f32.gmra.mxu0 %v462
    %v519 = vpop.f32.mrf.mxu0
    %v520 = vadd.f32 %v449, %v519
    %521 = vdwg.mxu0
    %522 = vmatpush.msra.mxu0 0.0
    %523 = vmatpush.msra.mxu0 0.0
    %524 = vmatpush.msra.mxu0 0.0
    %525 = vmatpush.msra.mxu0 0.0
    %526 = vmatpush.msra.mxu0 0.0
    %527 = vmatpush.msra.mxu0 0.0
    %528 = vmatpush.msra.mxu0 0.0
    %529 = vmatpush.msra.mxu0 0.0
    %530 = vmatpush.msra.mxu0 0.0
    %531 = vmatpush.msra.mxu0 0.0
    %532 = vmatpush.msra.mxu0 0.0
    %533 = vmatpush.msra.mxu0 0.0
    %534 = vmatpush.msra.mxu0 %v407
    %535 = vmatpush.msra.mxu0 %v347
    %536 = vmatpush.msra.mxu0 %v287
    %537 = vmatpush.msra.mxu0 %v227
    %538 = vmatmul.f32.gmra.mxu0 %v453
    %v539 = vpop.f32.mrf.mxu0
    %v540 = vadd.f32 %v434, %v539
    %541 = vmatmul.f32.gmra.mxu0 %v456
    %v542 = vpop.f32.mrf.mxu0
    %v543 = vadd.f32 %v439, %v542
    %544 = vmatmul.f32.gmra.mxu0 %v459
    %v545 = vpop.f32.mrf.mxu0
    %v546 = vadd.f32 %v444, %v545
    %547 = vmatmul.f32.gmra.mxu0 %v462
    %v548 = vpop.f32.mrf.mxu0
    %v549 = vadd.f32 %v449, %v548
    %550 = vdwg.mxu0
    %551 = vmatpush.msra.mxu0 0.0
    %552 = vmatpush.msra.mxu0 0.0
    %553 = vmatpush.msra.mxu0 0.0
    %554 = vmatpush.msra.mxu0 0.0
    %555 = vmatpush.msra.mxu0 0.0
    %556 = vmatpush.msra.mxu0 0.0
    %557 = vmatpush.msra.mxu0 0.0
    %558 = vmatpush.msra.mxu0 0.0
    %559 = vmatpush.msra.mxu0 0.0
    %560 = vmatpush.msra.mxu0 0.0
    %561 = vmatpush.msra.mxu0 0.0
    %562 = vmatpush.msra.mxu0 0.0
    %563 = vmatpush.msra.mxu0 %v422
    %564 = vmatpush.msra.mxu0 %v362
    %565 = vmatpush.msra.mxu0 %v302
    %566 = vmatpush.msra.mxu0 %v242
    %567 = vmatmul.f32.gmra.mxu0 %v453
    %v568 = vpop.f32.mrf.mxu0
    %v569 = vadd.f32 %v434, %v568
    %570 = vmatmul.f32.gmra.mxu0 %v456
    %v571 = vpop.f32.mrf.mxu0
    %v572 = vadd.f32 %v439, %v571
    %573 = vmatmul.f32.gmra.mxu0 %v459
    %v574 = vpop.f32.mrf.mxu0
    %v575 = vadd.f32 %v444, %v574
    %576 = vmatmul.f32.gmra.mxu0 %v462
    %v577 = vpop.f32.mrf.mxu0
    %v578 = vadd.f32 %v449, %v577
    %579 = vdwg.mxu0
    %v580 = vxor.u32 %v482, 2147483648
    %v581 = vxor.u32 %v511, 2147483648
    %v582 = vxor.u32 %v540, 2147483648
    %v583 = vxor.u32 %v569, 2147483648
    %v584 = vxor.u32 %v485, 2147483648
    %v585 = vxor.u32 %v514, 2147483648
    %v586 = vxor.u32 %v543, 2147483648
    %v587 = vxor.u32 %v572, 2147483648
    %v588 = vxor.u32 %v488, 2147483648
    %v589 = vxor.u32 %v517, 2147483648
    %v590 = vxor.u32 %v546, 2147483648
    %v591 = vxor.u32 %v575, 2147483648
    %v592 = vxor.u32 %v491, 2147483648
    %v593 = vxor.u32 %v520, 2147483648
    %v594 = vxor.u32 %v549, 2147483648
    %v595 = vxor.u32 %v578, 2147483648
    %v596 = vmul.f32 %v580, 1.442695
    %v597 = vpow.pop %v596
    %v598 = vmul.f32 %v581, 1.442695
    %v599 = vpow.pop %v598
    %v600 = vmul.f32 %v582, 1.442695
    %v601 = vpow.pop %v600
    %v602 = vmul.f32 %v583, 1.442695
    %v603 = vpow.pop %v602
    %v604 = vmul.f32 %v584, 1.442695
    %v605 = vpow.pop %v604
    %v606 = vmul.f32 %v585, 1.442695
    %v607 = vpow.pop %v606
    %v608 = vmul.f32 %v586, 1.442695
    %v609 = vpow.pop %v608
    %v610 = vmul.f32 %v587, 1.442695
    %v611 = vpow.pop %v610
    %v612 = vmul.f32 %v588, 1.442695
    %v613 = vpow.pop %v612
    %v614 = vmul.f32 %v589, 1.442695
    %v615 = vpow.pop %v614
    %v616 = vmul.f32 %v590, 1.442695
    %v617 = vpow.pop %v616
    %v618 = vmul.f32 %v591, 1.442695
    %v619 = vpow.pop %v618
    %v620 = vmul.f32 %v592, 1.442695
    %v621 = vpow.pop %v620
    %v622 = vmul.f32 %v593, 1.442695
    %v623 = vpow.pop %v622
    %v624 = vmul.f32 %v594, 1.442695
    %v625 = vpow.pop %v624
    %v626 = vmul.f32 %v595, 1.442695
    %v627 = vpow.pop %v626
    %v628 = vadd.f32 %v597, 1.0
    %v629 = vadd.f32 %v599, 1.0
    %v630 = vadd.f32 %v601, 1.0
    %v631 = vadd.f32 %v603, 1.0
    %v632 = vadd.f32 %v605, 1.0
    %v633 = vadd.f32 %v607, 1.0
    %v634 = vadd.f32 %v609, 1.0
    %v635 = vadd.f32 %v611, 1.0
    %v636 = vadd.f32 %v613, 1.0
    %v637 = vadd.f32 %v615, 1.0
    %v638 = vadd.f32 %v617, 1.0
    %v639 = vadd.f32 %v619, 1.0
    %v640 = vadd.f32 %v621, 1.0
    %v641 = vadd.f32 %v623, 1.0
    %v642 = vadd.f32 %v625, 1.0
    %v643 = vadd.f32 %v627, 1.0
    %v644 = vrcp.pop %v628
    %v645 = vmul.f32 %v628, %v644
    %v646 = vsub.f32 1.0, %v645
    %v647 = vmul.f32 %v644, %v646
    %v648 = vadd.f32 %v644, %v647
    %vm649 = vweird.f32 %v628
    %vm650 = vweird.f32 %v644
    %vm651 = vmor %vm649, %vm650
    %v652 = vsel %vm651, %v644, %v648
    %v653 = vand.u32 2147483647, %v628
    %vm654 = vcmp.eq.f32.partialorder %v653, 8.507059e+37
    %v655 = vand.u32 %v628, 2147483648
    %v656 = vor.u32 1.1754944e-38, %v655
    %v657 = vsel %vm654, %v656, %v652
    %v658 = vmul.f32 1.0, %v657
    %v659 = vrcp.pop %v629
    %v660 = vmul.f32 %v629, %v659
    %v661 = vsub.f32 1.0, %v660
    %v662 = vmul.f32 %v659, %v661
    %v663 = vadd.f32 %v659, %v662
    %vm664 = vweird.f32 %v629
    %vm665 = vweird.f32 %v659
    %vm666 = vmor %vm664, %vm665
    %v667 = vsel %vm666, %v659, %v663
    %v668 = vand.u32 2147483647, %v629
    %vm669 = vcmp.eq.f32.partialorder %v668, 8.507059e+37
    %v670 = vand.u32 %v629, 2147483648
    %v671 = vor.u32 1.1754944e-38, %v670
    %v672 = vsel %vm669, %v671, %v667
    %v673 = vmul.f32 1.0, %v672
    %v674 = vrcp.pop %v630
    %v675 = vmul.f32 %v630, %v674
    %v676 = vsub.f32 1.0, %v675
    %v677 = vmul.f32 %v674, %v676
    %v678 = vadd.f32 %v674, %v677
    %vm679 = vweird.f32 %v630
    %vm680 = vweird.f32 %v674
    %vm681 = vmor %vm679, %vm680
    %v682 = vsel %vm681, %v674, %v678
    %v683 = vand.u32 2147483647, %v630
    %vm684 = vcmp.eq.f32.partialorder %v683, 8.507059e+37
    %v685 = vand.u32 %v630, 2147483648
    %v686 = vor.u32 1.1754944e-38, %v685
    %v687 = vsel %vm684, %v686, %v682
    %v688 = vmul.f32 1.0, %v687
    %v689 = vrcp.pop %v631
    %v690 = vmul.f32 %v631, %v689
    %v691 = vsub.f32 1.0, %v690
    %v692 = vmul.f32 %v689, %v691
    %v693 = vadd.f32 %v689, %v692
    %vm694 = vweird.f32 %v631
    %vm695 = vweird.f32 %v689
    %vm696 = vmor %vm694, %vm695
    %v697 = vsel %vm696, %v689, %v693
    %v698 = vand.u32 2147483647, %v631
    %vm699 = vcmp.eq.f32.partialorder %v698, 8.507059e+37
    %v700 = vand.u32 %v631, 2147483648
    %v701 = vor.u32 1.1754944e-38, %v700
    %v702 = vsel %vm699, %v701, %v697
    %v703 = vmul.f32 1.0, %v702
    %v704 = vrcp.pop %v632
    %v705 = vmul.f32 %v632, %v704
    %v706 = vsub.f32 1.0, %v705
    %v707 = vmul.f32 %v704, %v706
    %v708 = vadd.f32 %v704, %v707
    %vm709 = vweird.f32 %v632
    %vm710 = vweird.f32 %v704
    %vm711 = vmor %vm709, %vm710
    %v712 = vsel %vm711, %v704, %v708
    %v713 = vand.u32 2147483647, %v632
    %vm714 = vcmp.eq.f32.partialorder %v713, 8.507059e+37
    %v715 = vand.u32 %v632, 2147483648
    %v716 = vor.u32 1.1754944e-38, %v715
    %v717 = vsel %vm714, %v716, %v712
    %v718 = vmul.f32 1.0, %v717
    %v719 = vrcp.pop %v633
    %v720 = vmul.f32 %v633, %v719
    %v721 = vsub.f32 1.0, %v720
    %v722 = vmul.f32 %v719, %v721
    %v723 = vadd.f32 %v719, %v722
    %vm724 = vweird.f32 %v633
    %vm725 = vweird.f32 %v719
    %vm726 = vmor %vm724, %vm725
    %v727 = vsel %vm726, %v719, %v723
    %v728 = vand.u32 2147483647, %v633
    %vm729 = vcmp.eq.f32.partialorder %v728, 8.507059e+37
    %v730 = vand.u32 %v633, 2147483648
    %v731 = vor.u32 1.1754944e-38, %v730
    %v732 = vsel %vm729, %v731, %v727
    %v733 = vmul.f32 1.0, %v732
    %v734 = vrcp.pop %v634
    %v735 = vmul.f32 %v634, %v734
    %v736 = vsub.f32 1.0, %v735
    %v737 = vmul.f32 %v734, %v736
    %v738 = vadd.f32 %v734, %v737
    %vm739 = vweird.f32 %v634
    %vm740 = vweird.f32 %v734
    %vm741 = vmor %vm739, %vm740
    %v742 = vsel %vm741, %v734, %v738
    %v743 = vand.u32 2147483647, %v634
    %vm744 = vcmp.eq.f32.partialorder %v743, 8.507059e+37
    %v745 = vand.u32 %v634, 2147483648
    %v746 = vor.u32 1.1754944e-38, %v745
    %v747 = vsel %vm744, %v746, %v742
    %v748 = vmul.f32 1.0, %v747
    %v749 = vrcp.pop %v635
    %v750 = vmul.f32 %v635, %v749
    %v751 = vsub.f32 1.0, %v750
    %v752 = vmul.f32 %v749, %v751
    %v753 = vadd.f32 %v749, %v752
    %vm754 = vweird.f32 %v635
    %vm755 = vweird.f32 %v749
    %vm756 = vmor %vm754, %vm755
    %v757 = vsel %vm756, %v749, %v753
    %v758 = vand.u32 2147483647, %v635
    %vm759 = vcmp.eq.f32.partialorder %v758, 8.507059e+37
    %v760 = vand.u32 %v635, 2147483648
    %v761 = vor.u32 1.1754944e-38, %v760
    %v762 = vsel %vm759, %v761, %v757
    %v763 = vmul.f32 1.0, %v762
    %v764 = vrcp.pop %v636
    %v765 = vmul.f32 %v636, %v764
    %v766 = vsub.f32 1.0, %v765
    %v767 = vmul.f32 %v764, %v766
    %v768 = vadd.f32 %v764, %v767
    %vm769 = vweird.f32 %v636
    %vm770 = vweird.f32 %v764
    %vm771 = vmor %vm769, %vm770
    %v772 = vsel %vm771, %v764, %v768
    %v773 = vand.u32 2147483647, %v636
    %vm774 = vcmp.eq.f32.partialorder %v773, 8.507059e+37
    %v775 = vand.u32 %v636, 2147483648
    %v776 = vor.u32 1.1754944e-38, %v775
    %v777 = vsel %vm774, %v776, %v772
    %v778 = vmul.f32 1.0, %v777
    %v779 = vrcp.pop %v637
    %v780 = vmul.f32 %v637, %v779
    %v781 = vsub.f32 1.0, %v780
    %v782 = vmul.f32 %v779, %v781
    %v783 = vadd.f32 %v779, %v782
    %vm784 = vweird.f32 %v637
    %vm785 = vweird.f32 %v779
    %vm786 = vmor %vm784, %vm785
    %v787 = vsel %vm786, %v779, %v783
    %v788 = vand.u32 2147483647, %v637
    %vm789 = vcmp.eq.f32.partialorder %v788, 8.507059e+37
    %v790 = vand.u32 %v637, 2147483648
    %v791 = vor.u32 1.1754944e-38, %v790
    %v792 = vsel %vm789, %v791, %v787
    %v793 = vmul.f32 1.0, %v792
    %v794 = vrcp.pop %v638
    %v795 = vmul.f32 %v638, %v794
    %v796 = vsub.f32 1.0, %v795
    %v797 = vmul.f32 %v794, %v796
    %v798 = vadd.f32 %v794, %v797
    %vm799 = vweird.f32 %v638
    %vm800 = vweird.f32 %v794
    %vm801 = vmor %vm799, %vm800
    %v802 = vsel %vm801, %v794, %v798
    %v803 = vand.u32 2147483647, %v638
    %vm804 = vcmp.eq.f32.partialorder %v803, 8.507059e+37
    %v805 = vand.u32 %v638, 2147483648
    %v806 = vor.u32 1.1754944e-38, %v805
    %v807 = vsel %vm804, %v806, %v802
    %v808 = vmul.f32 1.0, %v807
    %v809 = vrcp.pop %v639
    %v810 = vmul.f32 %v639, %v809
    %v811 = vsub.f32 1.0, %v810
    %v812 = vmul.f32 %v809, %v811
    %v813 = vadd.f32 %v809, %v812
    %vm814 = vweird.f32 %v639
    %vm815 = vweird.f32 %v809
    %vm816 = vmor %vm814, %vm815
    %v817 = vsel %vm816, %v809, %v813
    %v818 = vand.u32 2147483647, %v639
    %vm819 = vcmp.eq.f32.partialorder %v818, 8.507059e+37
    %v820 = vand.u32 %v639, 2147483648
    %v821 = vor.u32 1.1754944e-38, %v820
    %v822 = vsel %vm819, %v821, %v817
    %v823 = vmul.f32 1.0, %v822
    %v824 = vrcp.pop %v640
    %v825 = vmul.f32 %v640, %v824
    %v826 = vsub.f32 1.0, %v825
    %v827 = vmul.f32 %v824, %v826
    %v828 = vadd.f32 %v824, %v827
    %vm829 = vweird.f32 %v640
    %vm830 = vweird.f32 %v824
    %vm831 = vmor %vm829, %vm830
    %v832 = vsel %vm831, %v824, %v828
    %v833 = vand.u32 2147483647, %v640
    %vm834 = vcmp.eq.f32.partialorder %v833, 8.507059e+37
    %v835 = vand.u32 %v640, 2147483648
    %v836 = vor.u32 1.1754944e-38, %v835
    %v837 = vsel %vm834, %v836, %v832
    %v838 = vmul.f32 1.0, %v837
    %v839 = vrcp.pop %v641
    %v840 = vmul.f32 %v641, %v839
    %v841 = vsub.f32 1.0, %v840
    %v842 = vmul.f32 %v839, %v841
    %v843 = vadd.f32 %v839, %v842
    %vm844 = vweird.f32 %v641
    %vm845 = vweird.f32 %v839
    %vm846 = vmor %vm844, %vm845
    %v847 = vsel %vm846, %v839, %v843
    %v848 = vand.u32 2147483647, %v641
    %vm849 = vcmp.eq.f32.partialorder %v848, 8.507059e+37
    %v850 = vand.u32 %v641, 2147483648
    %v851 = vor.u32 1.1754944e-38, %v850
    %v852 = vsel %vm849, %v851, %v847
    %v853 = vmul.f32 1.0, %v852
    %v854 = vrcp.pop %v642
    %v855 = vmul.f32 %v642, %v854
    %v856 = vsub.f32 1.0, %v855
    %v857 = vmul.f32 %v854, %v856
    %v858 = vadd.f32 %v854, %v857
    %vm859 = vweird.f32 %v642
    %vm860 = vweird.f32 %v854
    %vm861 = vmor %vm859, %vm860
    %v862 = vsel %vm861, %v854, %v858
    %v863 = vand.u32 2147483647, %v642
    %vm864 = vcmp.eq.f32.partialorder %v863, 8.507059e+37
    %v865 = vand.u32 %v642, 2147483648
    %v866 = vor.u32 1.1754944e-38, %v865
    %v867 = vsel %vm864, %v866, %v862
    %v868 = vmul.f32 1.0, %v867
    %v869 = vrcp.pop %v643
    %v870 = vmul.f32 %v643, %v869
    %v871 = vsub.f32 1.0, %v870
    %v872 = vmul.f32 %v869, %v871
    %v873 = vadd.f32 %v869, %v872
    %vm874 = vweird.f32 %v643
    %vm875 = vweird.f32 %v869
    %vm876 = vmor %vm874, %vm875
    %v877 = vsel %vm876, %v869, %v873
    %v878 = vand.u32 2147483647, %v643
    %vm879 = vcmp.eq.f32.partialorder %v878, 8.507059e+37
    %v880 = vand.u32 %v643, 2147483648
    %v881 = vor.u32 1.1754944e-38, %v880
    %v882 = vsel %vm879, %v881, %v877
    %v883 = vmul.f32 1.0, %v882
    %v884 = vld [vmem:[%s5] sm:$0xff]
    %v885 = vld [vmem:[%s5 + $0x8] sm:$0xff]
    %v886 = vld [vmem:[%s5 + $0x10] sm:$0xff]
    %v887 = vld [vmem:[%s5 + $0x18] sm:$0xff]
    %889 = vset.pattern.permute.xlu0 0
    %890 = vperm.xlu0 %889, %v884
    %v891 = vpop.permute.xlu0 %890
    %894 = vset.pattern.permute.xlu0 0
    %895 = vperm.xlu0 %894, %v885
    %v896 = vpop.permute.xlu0 %895
    %899 = vset.pattern.permute.xlu0 0
    %900 = vperm.xlu0 %899, %v886
    %v901 = vpop.permute.xlu0 %900
    %904 = vset.pattern.permute.xlu0 0
    %905 = vperm.xlu0 %904, %v887
    %v906 = vpop.permute.xlu0 %905
    %v908 = vmul.f32 %v891, %v658
    %v909 = vmul.f32 %v891, %v673
    %v910 = vmul.f32 %v891, %v688
    %v911 = vmul.f32 %v891, %v703
    %v912 = vmul.f32 %v896, %v718
    %v913 = vmul.f32 %v896, %v733
    %v914 = vmul.f32 %v896, %v748
    %v915 = vmul.f32 %v896, %v763
    %v916 = vmul.f32 %v901, %v778
    %v917 = vmul.f32 %v901, %v793
    %v918 = vmul.f32 %v901, %v808
    %v919 = vmul.f32 %v901, %v823
    %v920 = vmul.f32 %v906, %v838
    %v921 = vmul.f32 %v906, %v853
    %v922 = vmul.f32 %v906, %v868
    %v923 = vmul.f32 %v906, %v883
    %v924 = vadd.f32 %v908, %v912
    %v925 = vadd.f32 %v924, %v916
    %v926 = vadd.f32 %v925, %v920
    %v927 = vrot.slane %v926, 4
    %v928 = vadd.f32 %v926, %v927
    %v929 = vrot.slane %v928, 2
    %v930 = vadd.f32 %v928, %v929
    %v931 = vrot.slane %v930, 1
    %v932 = vadd.f32 %v930, %v931
    %v933 = vadd.f32 %v909, %v913
    %v934 = vadd.f32 %v933, %v917
    %v935 = vadd.f32 %v934, %v921
    %v936 = vrot.slane %v935, 4
    %v937 = vadd.f32 %v935, %v936
    %v938 = vrot.slane %v937, 2
    %v939 = vadd.f32 %v937, %v938
    %v940 = vrot.slane %v939, 1
    %v941 = vadd.f32 %v939, %v940
    %v942 = vadd.f32 %v910, %v914
    %v943 = vadd.f32 %v942, %v918
    %v944 = vadd.f32 %v943, %v922
    %v945 = vrot.slane %v944, 4
    %v946 = vadd.f32 %v944, %v945
    %v947 = vrot.slane %v946, 2
    %v948 = vadd.f32 %v946, %v947
    %v949 = vrot.slane %v948, 1
    %v950 = vadd.f32 %v948, %v949
    %v951 = vadd.f32 %v911, %v915
    %v952 = vadd.f32 %v951, %v919
    %v953 = vadd.f32 %v952, %v923
    %v954 = vrot.slane %v953, 4
    %v955 = vadd.f32 %v953, %v954
    %v956 = vrot.slane %v955, 2
    %v957 = vadd.f32 %v955, %v956
    %v958 = vrot.slane %v957, 1
    %v959 = vadd.f32 %v957, %v958
    %v960 = vld [vmem:[#allocation2] sm:$0x1]
    %962 = vset.pattern.permute.xlu0 0
    %963 = vperm.xlu0 %962, %v960
    %v964 = vpop.permute.xlu0 %963
    %v966 = vperm.slane %v964, 0
    %v967 = vadd.f32 %v932, %v966
    %v968 = vadd.f32 %v941, %v966
    %v969 = vadd.f32 %v950, %v966
    %v970 = vadd.f32 %v959, %v966
    %v975 = vrot.slane %v968, 7
    %v976 = vrot.slane %v969, 6
    %v977 = vrot.slane %v970, 5
    %vm978 = vcmask 1040384
    %v979 = vsel %vm978, %v967, %v975
    %vm980 = vcmask 1042434
    %v981 = vsel %vm980, %v976, %v977
    %vm982 = vcmask 1041408
    %v983 = vsel %vm982, %v979, %v981
    %v985 = vlaneseq
    %vm986 = vcmp.ge.s32.totalorder %v985, 0
    %vm987 = vcmp.lt.s32.totalorder %v985, 512
    %vm988 = vmand %vm986, %vm987
    %989 = vst.msk [vmem:[#allocation3] sm:$0xf] %vm988, %v983
    // Predicated region
    $region30: #{tpu_custom_call.1} parent=1 // pred_check
      _
    $region31: #{tpu_custom_call.1} parent=1 // pred_check_branch
      %991 = sbr.rel (0) target = $region33
    $region32: #{tpu_custom_call.1} parent=1 // pred_region
      %993 = vsyncadd [#allocation4], 0
      %s995 = sshll.u32 [#allocation3], 4
      %s996 = int_to_ptr.vmem [resolvable:$true] %s995
      %s997 = sshll.u32 %s7, 4
      %s998 = int_to_ptr.hbm [resolvable:$true] %s997
      %1000 = dma.vmem_to_hbm [thread:$0]  %s996, 64, %s998, [#allocation4]
    $region33: #{tpu_custom_call.1} parent=1 // pred_fallthru
      _
    // Predicated region
    $region34: #{tpu_custom_call.1} parent=1 // pred_check
      _
    $region35: #{tpu_custom_call.1} parent=1 // pred_check_branch
      %1002 = sbr.rel (0) target = $region37
    $region36: #{tpu_custom_call.1} parent=1 // pred_region
      %1004 = dma.done [#allocation4], 64
    $region37: #{tpu_custom_call.1} parent=1 // pred_fallthru
      _
    %1005 = vsyncpa [#allocation4], 1

</llo_original>
